<compile_context>
chip_gen: v5e
topology: v5e:2x2
jax: 0.10.0
libtpu: 0.0.40
codegen_flags: <defaults>
</compile_context>

<pallas_src>
import jax
import jax.numpy as jnp
from jax.experimental import pallas as pl
from jax.experimental.pallas import tpu as pltpu


def _cg_vote_kernel(feat_ref, xyzT_ref, w1_ref, shift1_ref, w2_ref, cst_ref,
                    out_ref):
    # feat block: (1, C_in, TN) read as-is (f32 from HBM); cast per-tile for the
    # MXU (no-op on the exact f32 path).
    x = feat_ref[0].astype(w1_ref.dtype)                                # (C_in, TN)

    # conv1 (1x1) with the eval-mode BN scale pre-folded into W1; f32 accumulate
    # on the MXU, then BN/conv1 shift + ReLU on the VPU.
    h = jnp.dot(w1_ref[...], x, preferred_element_type=jnp.float32)     # (mlp, TN)
    h = jnp.maximum(h + shift1_ref[...], 0.0)

    # conv2 (1x1): (3, mlp) @ (mlp, TN) -> raw center offsets (channel-first).
    # (MXU output-row utilization is 3/128..3/256 here; hidden under the HBM
    #  roofline, intentionally left on the MXU.)
    b2 = cst_ref[:, 0:1]
    lo = cst_ref[:, 1:2]
    hi = cst_ref[:, 2:3]
    off = jnp.dot(w2_ref[...], h.astype(w2_ref.dtype),
                  preferred_element_type=jnp.float32) + b2              # (3, TN)

    # Clamp exactly as torch.min(torch.max(off, min_off), -min_off).
    new = xyzT_ref[0] + jnp.minimum(jnp.maximum(off, lo), hi)

    # Packed lane-dense output slab: slot 0 = ctr_offset^T (un-clamped),
    # slot 1 = candidate_xyz^T. Two aligned full-tile stores, one DMA stream.
    out_ref[0, 0] = off
    out_ref[0, 1] = new


def _vmem_bytes_estimate(tn, c_in, mlp, item_c):
    """Rough per-call VMEM footprint (double-buffered blocks + intermediates)."""
    step = 2 * (c_in * tn * 4           # feature block (f32, read as-is)
                + 8 * tn * 4            # xyz^T block (3 -> 8 sublane pad)
                + 2 * 8 * tn * 4)       # packed output block (2 x (3 -> 8) pad)
    weights = 2 * (mlp * c_in * item_c  # W1 (BN scale folded)
                   + 8 * mlp * item_c   # W2 (3 -> 8 pad)
                   + mlp * 128 * 4      # shift column (1 -> 128 lane pad)
                   + 8 * 128 * 4)       # packed b2 / lo / hi
    interm = (mlp * tn * 4                   # h (f32 accumulate)
              + (mlp + c_in) * tn * item_c   # compute-dtype copies of h and x
              + 2 * 8 * tn * 4)              # off / new (3 -> 8 pad)
    return step + weights + interm


def _pick_point_tile(n, batch, c_in, mlp, item_c, budget=36 << 20):
    """Largest lane-dense tile dividing N that fits the VMEM budget."""
    best = None
    for tn in (8192, 4096, 2048, 1024, 512):
        if n % tn == 0 and _vmem_bytes_estimate(tn, c_in, mlp, item_c) <= budget:
            best = tn
            break
    if best is None:
        for tn in (256, 128):
            if n % tn == 0:
                best = tn
                break
        if best is None:
            best = n  # irregular N: single full-N block (always legal)
    # v7x has 2 TensorCores sharding parallel grid axes; with B == 1 make sure
    # there are at least 2 grid points so both cores get work.
    if batch == 1 and best == n and n % 256 == 0:
        best = n // 2
    return best


def candidate_generation_vote(feat_ncl, xyz, params, max_translate_range,
                              *, compute_dtype=jnp.bfloat16, tn=None,
                              channel_first_outputs=False):
    """feat_ncl: [B, C_in, N] (native PyTorch Conv1d NCL layout, consumed as-is).
    xyz: [B, N, 3].

    Returns (ctr_offsets, new_xyz) == output_dict['ctr_offset'],
    output_dict['candidate_xyz'] ([B,N,3] each, or [B,3,N] slabs if
    channel_first_outputs=True and the consumer can take them).
    """
    B, C_in, N = feat_ncl.shape
    eps = 1e-5
    w1, b1 = params["w1"], params["b1"]                 # [C_in, mlp], [mlp]
    gamma, beta = params["gamma"], params["beta"]       # [mlp]
    rmean, rvar = params["rmean"], params["rvar"]       # [mlp]
    w2, b2 = params["w2"], params["b2"]                 # [mlp, 3], [3]
    mlp = w1.shape[1]

    item_c = jnp.dtype(compute_dtype).itemsize
    if tn is None:
        tn = _pick_point_tile(N, B, C_in, mlp, item_c)
    assert N % tn == 0, f"point tile {tn} must divide N={N}"
    n_tiles = N // tn

    # Fold conv1 bias + eval-mode BatchNorm into W1 (scale) and a shift column.
    scale = gamma / jnp.sqrt(rvar + eps)                                # [mlp]
    w1_cf = (jnp.transpose(w1) * scale[:, None]).astype(compute_dtype)  # [mlp, C_in]
    shift = ((b1 - rmean) * scale + beta).astype(jnp.float32).reshape(mlp, 1)
    w2_cf = jnp.transpose(w2).astype(compute_dtype)                     # [3, mlp]

    # Pack the tiny per-axis constants into one (3, 3) block: [b2 | lo | hi].
    lo = jnp.asarray(max_translate_range, jnp.float32).reshape(3, 1)
    consts = jnp.concatenate(
        [jnp.asarray(b2, jnp.float32).reshape(3, 1), lo, -lo], axis=1)  # (3, 3)

    # Features stay f32 in HBM (cast happens per-tile inside the kernel); only
    # xyz (tiny) is pre-transposed to the channel-first layout.
    xyz_t = jnp.transpose(xyz, (0, 2, 1)).astype(jnp.float32)           # [B, 3, N]

    # VMEM budget: default tile picker keeps this <= ~38 MiB (safe on v7x's
    # 64 MiB VMEM); an explicitly larger tn may only be safe on v5e/v6e.
    est = _vmem_bytes_estimate(tn, C_in, mlp, item_c) + (2 << 20)
    vmem_limit = int(min(max(16 << 20, est), 100 << 20))

    const = lambda b, n: (0, 0)
    packed = pl.pallas_call(
        _cg_vote_kernel,
        out_shape=jax.ShapeDtypeStruct((B, 2, 3, N), jnp.float32),
        grid_spec=pltpu.PrefetchScalarGridSpec(
            num_scalar_prefetch=0,
            grid=(B, n_tiles),
            in_specs=[
                pl.BlockSpec((1, C_in, tn), lambda b, n: (b, 0, n)),    # features (NCL, f32)
                pl.BlockSpec((1, 3, tn), lambda b, n: (b, 0, n)),       # xyz^T
                pl.BlockSpec((mlp, C_in), const),                       # W1 * bn_scale
                pl.BlockSpec((mlp, 1), const),                          # BN shift (+conv1 bias)
                pl.BlockSpec((3, mlp), const),                          # W2 (channel-first)
                pl.BlockSpec((3, 3), const),                            # [b2 | lo | hi]
            ],
            out_specs=pl.BlockSpec((1, 2, 3, tn), lambda b, n: (b, 0, 0, n)),
        ),
        compiler_params=pltpu.CompilerParams(
            dimension_semantics=("parallel", "parallel"),
            vmem_limit_bytes=vmem_limit),
    )(feat_ncl, xyz_t, w1_cf, shift, w2_cf, consts)

    if channel_first_outputs:
        # Consumers that accept NCL slabs skip the transpose epilogue entirely.
        return packed[:, 0], packed[:, 1]                               # [B,3,N] each

    # One small channel-first -> point-first transpose, then split (PyTorch layout).
    pk = jnp.transpose(packed.reshape(B, 6, N), (0, 2, 1))              # [B, N, 6]
    ctr = pk[..., 0:3]
    new_xyz = pk[..., 3:6]
    return ctr, new_xyz


def _reference(feat_ncl, xyz, params, max_translate_range):
    """Plain-JAX f32 reference mirroring the PyTorch forward (eval-mode BN)."""
    eps = 1e-5
    x = jnp.transpose(feat_ncl, (0, 2, 1))                              # [B, N, C_in]
    h = x @ params["w1"] + params["b1"]
    h = (h - params["rmean"]) / jnp.sqrt(params["rvar"] + eps) * params["gamma"] + params["beta"]
    h = jnp.maximum(h, 0.0)
    off = h @ params["w2"] + params["b2"]                               # [B, N, 3]
    m = jnp.asarray(max_translate_range, jnp.float32).reshape(1, 1, 3)
    off_c = jnp.minimum(jnp.maximum(off, m), -m)
    return off, xyz + off_c


def _make_params(key, c_in, mlp):
    ks = jax.random.split(key, 6)
    return {
        "w1": jax.random.normal(ks[0], (c_in, mlp), jnp.float32) * 0.1,
        "b1": jax.random.normal(ks[1], (mlp,), jnp.float32) * 0.1,
        "gamma": jnp.ones((mlp,), jnp.float32),
        "beta": jnp.zeros((mlp,), jnp.float32),
        "rmean": jax.random.normal(ks[2], (mlp,), jnp.float32) * 0.05,
        "rvar": jnp.abs(jax.random.normal(ks[3], (mlp,), jnp.float32)) * 0.1 + 0.9,
        "w2": jax.random.normal(ks[4], (mlp, 3), jnp.float32) * 0.1,
        "b2": jax.random.normal(ks[5], (3,), jnp.float32) * 0.1,
    }


if __name__ == "__main__":
    # Small synthetic shapes consistent with the module: vote_input_dim=C_in, mlp hidden.
    B, N, C_in, MLP = 2, 256, 32, 32
    key = jax.random.PRNGKey(0)
    k_feat, k_xyz, k_par, k_feat1, k_xyz1 = jax.random.split(key, 5)

    feat_ncl = jax.random.normal(k_feat, (B, C_in, N), jnp.float32)     # PyTorch NCL layout
    xyz = jax.random.normal(k_xyz, (B, N, 3), jnp.float32)
    params = _make_params(k_par, C_in, MLP)
    max_translate_range = jnp.array([-3.0, -3.0, -2.0], jnp.float32)    # cfg.neck.MAX_TRANSLATE_RANGE

    ctr_ref, new_ref = _reference(feat_ncl, xyz, params, max_translate_range)

    # Exact-semantics f32 path (also exercises a multi-tile grid: grid = (B, N//128)).
    ctr32, new32 = candidate_generation_vote(
        feat_ncl, xyz, params, max_translate_range,
        compute_dtype=jnp.float32, tn=128)
    jax.block_until_ready((ctr32, new32))
    assert jnp.allclose(ctr32, ctr_ref, atol=1e-4, rtol=1e-4)
    assert jnp.allclose(new32, new_ref, atol=1e-4, rtol=1e-4)

    # Default bf16-matmul path (f32 features read from HBM, per-tile cast in-kernel).
    ctr_bf, new_bf = candidate_generation_vote(feat_ncl, xyz, params, max_translate_range)
    jax.block_until_ready((ctr_bf, new_bf))
    assert jnp.allclose(ctr_bf, ctr_ref, atol=5e-2, rtol=5e-2)
    assert jnp.allclose(new_bf, new_ref, atol=5e-2, rtol=5e-2)

    # B == 1 path: tile picker halves the full-N tile so both v7x TCs get work.
    N1 = 512
    feat1 = jax.random.normal(k_feat1, (1, C_in, N1), jnp.float32)
    xyz1 = jax.random.normal(k_xyz1, (1, N1, 3), jnp.float32)
    ctr1_ref, new1_ref = _reference(feat1, xyz1, params, max_translate_range)
    ctr1, new1 = candidate_generation_vote(
        feat1, xyz1, params, max_translate_range, compute_dtype=jnp.float32)
    jax.block_until_ready((ctr1, new1))
    assert jnp.allclose(ctr1, ctr1_ref, atol=1e-4, rtol=1e-4)
    assert jnp.allclose(new1, new1_ref, atol=1e-4, rtol=1e-4)

    print("KERNEL_OK")
</pallas_src>

<mosaic_0001>
module attributes {stable_mosaic.version = 11 : i64} {
  func.func @_cg_vote_kernel(%arg0: i32, %arg1: i32, %arg2: memref<1x32x128xf32, #tpu.memory_space<vmem>>, %arg3: memref<1x3x128xf32, #tpu.memory_space<vmem>>, %arg4: memref<32x32xf32, #tpu.memory_space<vmem>>, %arg5: memref<32x1xf32, #tpu.memory_space<vmem>>, %arg6: memref<3x32xf32, #tpu.memory_space<vmem>>, %arg7: memref<3x3xf32, #tpu.memory_space<vmem>>, %arg8: memref<1x2x3x128xf32, #tpu.memory_space<vmem>>) attributes {dimension_semantics = [#tpu.dimension_semantics<parallel>, #tpu.dimension_semantics<parallel>], iteration_bounds = array<i64: 2, 2>, scalar_prefetch = 0 : i64, scratch_operands = 0 : i64, tpu.core_type = #tpu.core_type<tc>, window_params = [{transform_indices = @transform_0, window_bounds = array<i64: 1, 32, 128>}, {transform_indices = @transform_1, window_bounds = array<i64: 1, 3, 128>}, {pipeline_mode = #tpu.pipeline_mode<synchronous>, transform_indices = @transform_2, window_bounds = array<i64: 32, 32>}, {pipeline_mode = #tpu.pipeline_mode<synchronous>, transform_indices = @transform_3, window_bounds = array<i64: 32, 1>}, {pipeline_mode = #tpu.pipeline_mode<synchronous>, transform_indices = @transform_4, window_bounds = array<i64: 3, 32>}, {pipeline_mode = #tpu.pipeline_mode<synchronous>, transform_indices = @transform_5, window_bounds = array<i64: 3, 3>}, {transform_indices = @transform_6, window_bounds = array<i64: 1, 2, 3, 128>}]} {
    %c0 = arith.constant 0 : index
    %c0_0 = arith.constant 0 : index
    %c0_1 = arith.constant 0 : index
    %0 = vector.load %arg2[%c0, %c0_0, %c0_1] : memref<1x32x128xf32, #tpu.memory_space<vmem>>, vector<1x32x128xf32>
    %1 = vector.shape_cast %0 : vector<1x32x128xf32> to vector<32x128xf32>
    %c0_2 = arith.constant 0 : index
    %c0_3 = arith.constant 0 : index
    %2 = vector.load %arg4[%c0_2, %c0_3] : memref<32x32xf32, #tpu.memory_space<vmem>>, vector<32x32xf32>
    %cst = arith.constant dense<0.000000e+00> : vector<32x128xf32>
    %3 = tpu.matmul %2, %1, %cst {dimension_numbers = #tpu.dot_dimension_numbers<[1], [0], [0], [1], [0, 0, 1, 1], [], []>} : vector<32x32xf32>, vector<32x128xf32>, vector<32x128xf32> -> vector<32x128xf32>
    %c0_4 = arith.constant 0 : index
    %c0_5 = arith.constant 0 : index
    %4 = vector.load %arg5[%c0_4, %c0_5] : memref<32x1xf32, #tpu.memory_space<vmem>>, vector<32x1xf32>
    %5 = vector.broadcast %4 : vector<32x1xf32> to vector<32x128xf32>
    %6 = arith.addf %3, %5 : vector<32x128xf32>
    %cst_6 = arith.constant 0.000000e+00 : f32
    %7 = vector.broadcast %cst_6 : f32 to vector<32x128xf32>
    %8 = arith.maximumf %6, %7 : vector<32x128xf32>
    %c0_7 = arith.constant 0 : index
    %c0_8 = arith.constant 0 : index
    %9 = vector.load %arg7[%c0_7, %c0_8] : memref<3x3xf32, #tpu.memory_space<vmem>>, vector<3x1xf32>
    %c0_9 = arith.constant 0 : index
    %c1 = arith.constant 1 : index
    %10 = vector.load %arg7[%c0_9, %c1] : memref<3x3xf32, #tpu.memory_space<vmem>>, vector<3x1xf32>
    %c0_10 = arith.constant 0 : index
    %c2 = arith.constant 2 : index
    %11 = vector.load %arg7[%c0_10, %c2] : memref<3x3xf32, #tpu.memory_space<vmem>>, vector<3x1xf32>
    %c0_11 = arith.constant 0 : index
    %c0_12 = arith.constant 0 : index
    %12 = vector.load %arg6[%c0_11, %c0_12] : memref<3x32xf32, #tpu.memory_space<vmem>>, vector<3x32xf32>
    %cst_13 = arith.constant dense<0.000000e+00> : vector<3x128xf32>
    %13 = tpu.matmul %12, %8, %cst_13 {dimension_numbers = #tpu.dot_dimension_numbers<[1], [0], [0], [1], [0, 0, 1, 1], [], []>} : vector<3x32xf32>, vector<32x128xf32>, vector<3x128xf32> -> vector<3x128xf32>
    %14 = vector.broadcast %9 : vector<3x1xf32> to vector<3x128xf32>
    %15 = arith.addf %13, %14 : vector<3x128xf32>
    %c0_14 = arith.constant 0 : index
    %c0_15 = arith.constant 0 : index
    %c0_16 = arith.constant 0 : index
    %16 = vector.load %arg3[%c0_14, %c0_15, %c0_16] : memref<1x3x128xf32, #tpu.memory_space<vmem>>, vector<1x3x128xf32>
    %17 = vector.shape_cast %16 : vector<1x3x128xf32> to vector<3x128xf32>
    %18 = vector.broadcast %10 : vector<3x1xf32> to vector<3x128xf32>
    %19 = arith.maximumf %15, %18 : vector<3x128xf32>
    %20 = vector.broadcast %11 : vector<3x1xf32> to vector<3x128xf32>
    %21 = arith.minimumf %19, %20 : vector<3x128xf32>
    %22 = arith.addf %17, %21 : vector<3x128xf32>
    %c0_17 = arith.constant 0 : index
    %c0_18 = arith.constant 0 : index
    %c0_19 = arith.constant 0 : index
    %c0_20 = arith.constant 0 : index
    %23 = vector.load %arg8[%c0_17, %c0_18, %c0_19, %c0_20] : memref<1x2x3x128xf32, #tpu.memory_space<vmem>>, vector<1x1x3x128xf32>
    %24 = vector.shape_cast %23 : vector<1x1x3x128xf32> to vector<3x128xf32>
    %25 = vector.shape_cast %15 : vector<3x128xf32> to vector<1x1x3x128xf32>
    tpu.vector_store %arg8[%c0_17, %c0_18, %c0_19, %c0_20], %25 {strides = array<i32>} : memref<1x2x3x128xf32, #tpu.memory_space<vmem>>, vector<1x1x3x128xf32>,
    %c0_21 = arith.constant 0 : index
    %c1_22 = arith.constant 1 : index
    %c0_23 = arith.constant 0 : index
    %c0_24 = arith.constant 0 : index
    %26 = vector.load %arg8[%c0_21, %c1_22, %c0_23, %c0_24] : memref<1x2x3x128xf32, #tpu.memory_space<vmem>>, vector<1x1x3x128xf32>
    %27 = vector.shape_cast %26 : vector<1x1x3x128xf32> to vector<3x128xf32>
    %28 = vector.shape_cast %22 : vector<3x128xf32> to vector<1x1x3x128xf32>
    tpu.vector_store %arg8[%c0_21, %c1_22, %c0_23, %c0_24], %28 {strides = array<i32>} : memref<1x2x3x128xf32, #tpu.memory_space<vmem>>, vector<1x1x3x128xf32>,
    return
  }
  func.func @transform_0(%arg0: i32, %arg1: i32) -> (i32, i32, i32) {
    %c0_i32 = arith.constant 0 : i32
    %c0_i32_0 = arith.constant 0 : i32
    return %arg0, %c0_i32, %arg1 : i32, i32, i32
  }
  func.func @transform_1(%arg0: i32, %arg1: i32) -> (i32, i32, i32) {
    %c0_i32 = arith.constant 0 : i32
    %c0_i32_0 = arith.constant 0 : i32
    return %arg0, %c0_i32, %arg1 : i32, i32, i32
  }
  func.func @transform_2(%arg0: i32, %arg1: i32) -> (i32, i32) {
    %c0_i32 = arith.constant 0 : i32
    %c0_i32_0 = arith.constant 0 : i32
    %c0_i32_1 = arith.constant 0 : i32
    return %c0_i32, %c0_i32_0 : i32, i32
  }
  func.func @transform_3(%arg0: i32, %arg1: i32) -> (i32, i32) {
    %c0_i32 = arith.constant 0 : i32
    %c0_i32_0 = arith.constant 0 : i32
    %c0_i32_1 = arith.constant 0 : i32
    return %c0_i32, %c0_i32_0 : i32, i32
  }
  func.func @transform_4(%arg0: i32, %arg1: i32) -> (i32, i32) {
    %c0_i32 = arith.constant 0 : i32
    %c0_i32_0 = arith.constant 0 : i32
    %c0_i32_1 = arith.constant 0 : i32
    return %c0_i32, %c0_i32_0 : i32, i32
  }
  func.func @transform_5(%arg0: i32, %arg1: i32) -> (i32, i32) {
    %c0_i32 = arith.constant 0 : i32
    %c0_i32_0 = arith.constant 0 : i32
    %c0_i32_1 = arith.constant 0 : i32
    return %c0_i32, %c0_i32_0 : i32, i32
  }
  func.func @transform_6(%arg0: i32, %arg1: i32) -> (i32, i32, i32, i32) {
    %c0_i32 = arith.constant 0 : i32
    %c0_i32_0 = arith.constant 0 : i32
    %c0_i32_1 = arith.constant 0 : i32
    return %arg0, %c0_i32, %c0_i32_0, %arg1 : i32, i32, i32, i32
  }
}

</mosaic_0001>

<llo_original>
// kernel: tpu_custom_call.1
$region0: #{tpu_custom_call.1}
  #allocation0 [shape = 'u32[]', space=smem, size = 0x4, offset = 0x4, fixed_abs, tag = 'smem constant byte address 0x4 - core index']
  #allocation1 [shape = 'u32[72,128]{1,0:T(1,128)}', space=vmem, size = 0x9000, scoped, tag = 'internal scratch']
  %s0 = inlined_call_operand.hbm [shape: f32[2,32,256], index: 0, kind: input, shape index: {}]
  %s1 = inlined_call_operand.vmem [shape: f32[2,3,256], index: 1, kind: input, shape index: {}]
  %s2 = inlined_call_operand.vmem [shape: f32[32,32], index: 2, kind: input, shape index: {}]
  %s3 = inlined_call_operand.vmem [shape: f32[32,1], index: 3, kind: input, shape index: {}]
  %s4 = inlined_call_operand.vmem [shape: f32[3,32], index: 4, kind: input, shape index: {}]
  %s5 = inlined_call_operand.vmem [shape: f32[3,3], index: 5, kind: input, shape index: {}]
  %s6 = inlined_call_operand.vmem [shape: f32[2,2,3,256], index: 6, kind: output, shape index: {}]
  %s7 = sld [smem:[#allocation0]]
  $region98: #{tpu_custom_call.1} parent=0
    _
  %s9 = ssub.s32 1, %s7
  %s10 = scalar_select 0, %s9, %s7
  $region1: #{tpu_custom_call.1} parent=0
    #allocation2 [shape = 'u8[32768]{0}', space=vmem, size = 0x8000, scoped, tag = 'input window, operand 0']
    #allocation3 [shape = 's32[2]{0}', space=sflag, size = 0x8, scoped, tag = 'scoped memory for tpu_custom_call.1']
    #allocation4 [shape = 'u8[8192]{0}', space=vmem, size = 0x2000, scoped, tag = 'output window, operand 0']
    %11 = vsyncpa [#allocation3], 0
    %s12 = scalar_lea.sflag [#allocation3], 1
    %13 = vsyncpa %s12, 0
    loop: start=0, step=1, limit=6
    $region2: #{tpu_custom_call.1} parent=1 // loop_pre_header
      _
    $region3: #{tpu_custom_call.1} parent=1 // loop_header
      %s15 = sphi 0, %s19
      %p16 = scmp.ge.s32.totalorder %s15, 6
      %s22 = sphi 0, %s34
      %s23 = sphi 0, %s30
      %s24 = sphi 0, %s22
      %s25 = sphi 0, %s23
      %s26 = sphi 0, %s24
      %s27 = sphi 0, %s25
      %s39 = sphi 0, %s41
      %s42 = sphi 0, %s39
      %s43 = sphi 0, %s42
      %s59 = sphi 0, %s43
      %s67 = sphi 0, %s69
      %s70 = sphi 0, %s67
      %s71 = sphi 0, %s70
      %s87 = sphi 0, %s71
      %s91 = sphi 0, %s91
      %s93 = sphi 0, %s91
      %s94 = sphi 0, %s93
      %s108 = sphi 0, %s94
      %s112 = sphi 0, %s112
      %s114 = sphi 0, %s112
      %s115 = sphi 0, %s114
      %s129 = sphi 0, %s115
      %s133 = sphi 0, %s133
      %s135 = sphi 0, %s133
      %s136 = sphi 0, %s135
      %s150 = sphi 0, %s136
      %s154 = sphi 0, %s154
      %s156 = sphi 0, %s154
      %s157 = sphi 0, %s156
      %s171 = sphi 0, %s157
      %s179 = sphi 0, %s181
      %s182 = sphi 0, %s179
      %s183 = sphi 0, %s182
      %s199 = sphi 0, %s183
    $region4: #{tpu_custom_call.1} parent=1 // loop_header_branch
      %18 = sbr.rel (%p16) target = $region8
    $region5: #{tpu_custom_call.1} parent=1 // loop_body
      %s20 = ssub.s32 %s15, 1
      %s21 = ssub.s32 %s15, 2
      %s28 = sadd.s32 1, %s23
      %p29 = scmp.ge.s32.totalorder %s28, 2
      %s30 = scalar_select %p29, 0, %s28
      %s31 = sadd.s32 1, %s22
      %s32 = scalar_select %p29, %s31, %s22
      %p33 = scmp.ge.s32.totalorder %s32, 2
      %s34 = scalar_select %p33, 0, %s32
      %s35 = ssub.s32 %s22, %s34
      %s36 = ssub.s32 %s23, %s30
      %s37 = sor.u32 %s35, %s36
      %p38 = scmp.eq.s32.totalorder %s37, 0
      %s40 = sadd.s32 %s39, 1
      %s41 = scalar_select %p38, %s39, %s40
      %p44 = pneg %p38
      %p45 = scmp.eq.s32.totalorder %s15, 3
      %p46 = por %p44, %p45
      %p47 = scmp.ne.s32.totalorder %s39, %s42
      %p48 = scmp.eq.s32.totalorder %s15, 0
      %p49 = por %p47, %p48
      %p50 = scmp.ne.s32.totalorder %s39, %s42
      %p51 = scmp.eq.s32.totalorder %s20, 3
      %p52 = por %p50, %p51
      %p53 = scmp.ne.s32.totalorder %s42, %s43
      %p54 = scmp.eq.s32.totalorder %s20, 0
      %p55 = por %p53, %p54
      %p56 = scmp.ne.s32.totalorder %s42, %s43
      %p57 = scmp.eq.s32.totalorder %s21, 3
      %p58 = por %p56, %p57
      %p60 = scmp.ne.s32.totalorder %s43, %s59
      %p61 = scmp.eq.s32.totalorder %s21, 0
      %p62 = por %p60, %p61
      %s63 = ssub.s32 %s22, %s34
      %s64 = ssub.s32 %s23, %s30
      %s65 = sor.u32 %s63, %s64
      %p66 = scmp.eq.s32.totalorder %s65, 0
      %s68 = sadd.s32 %s67, 1
      %s69 = scalar_select %p66, %s67, %s68
      %p72 = pneg %p66
      %p73 = scmp.eq.s32.totalorder %s15, 3
      %p74 = por %p72, %p73
      %p75 = scmp.ne.s32.totalorder %s67, %s70
      %p76 = scmp.eq.s32.totalorder %s15, 0
      %p77 = por %p75, %p76
      %p78 = scmp.ne.s32.totalorder %s67, %s70
      %p79 = scmp.eq.s32.totalorder %s20, 3
      %p80 = por %p78, %p79
      %p81 = scmp.ne.s32.totalorder %s70, %s71
      %p82 = scmp.eq.s32.totalorder %s20, 0
      %p83 = por %p81, %p82
      %p84 = scmp.ne.s32.totalorder %s70, %s71
      %p85 = scmp.eq.s32.totalorder %s21, 3
      %p86 = por %p84, %p85
      %p88 = scmp.ne.s32.totalorder %s71, %s87
      %p89 = scmp.eq.s32.totalorder %s21, 0
      %p90 = por %p88, %p89
      %s92 = sadd.s32 %s91, 1
      %p95 = scmp.eq.s32.totalorder %s15, 3
      %p96 = scmp.ne.s32.totalorder %s91, %s93
      %p97 = scmp.eq.s32.totalorder %s15, 0
      %p98 = por %p96, %p97
      %p99 = scmp.ne.s32.totalorder %s91, %s93
      %p100 = scmp.eq.s32.totalorder %s20, 3
      %p101 = por %p99, %p100
      %p102 = scmp.ne.s32.totalorder %s93, %s94
      %p103 = scmp.eq.s32.totalorder %s20, 0
      %p104 = por %p102, %p103
      %p105 = scmp.ne.s32.totalorder %s93, %s94
      %p106 = scmp.eq.s32.totalorder %s21, 3
      %p107 = por %p105, %p106
      %p109 = scmp.ne.s32.totalorder %s94, %s108
      %p110 = scmp.eq.s32.totalorder %s21, 0
      %p111 = por %p109, %p110
      %s113 = sadd.s32 %s112, 1
      %p116 = scmp.eq.s32.totalorder %s15, 3
      %p117 = scmp.ne.s32.totalorder %s112, %s114
      %p118 = scmp.eq.s32.totalorder %s15, 0
      %p119 = por %p117, %p118
      %p120 = scmp.ne.s32.totalorder %s112, %s114
      %p121 = scmp.eq.s32.totalorder %s20, 3
      %p122 = por %p120, %p121
      %p123 = scmp.ne.s32.totalorder %s114, %s115
      %p124 = scmp.eq.s32.totalorder %s20, 0
      %p125 = por %p123, %p124
      %p126 = scmp.ne.s32.totalorder %s114, %s115
      %p127 = scmp.eq.s32.totalorder %s21, 3
      %p128 = por %p126, %p127
      %p130 = scmp.ne.s32.totalorder %s115, %s129
      %p131 = scmp.eq.s32.totalorder %s21, 0
      %p132 = por %p130, %p131
      %s134 = sadd.s32 %s133, 1
      %p137 = scmp.eq.s32.totalorder %s15, 3
      %p138 = scmp.ne.s32.totalorder %s133, %s135
      %p139 = scmp.eq.s32.totalorder %s15, 0
      %p140 = por %p138, %p139
      %p141 = scmp.ne.s32.totalorder %s133, %s135
      %p142 = scmp.eq.s32.totalorder %s20, 3
      %p143 = por %p141, %p142
      %p144 = scmp.ne.s32.totalorder %s135, %s136
      %p145 = scmp.eq.s32.totalorder %s20, 0
      %p146 = por %p144, %p145
      %p147 = scmp.ne.s32.totalorder %s135, %s136
      %p148 = scmp.eq.s32.totalorder %s21, 3
      %p149 = por %p147, %p148
      %p151 = scmp.ne.s32.totalorder %s136, %s150
      %p152 = scmp.eq.s32.totalorder %s21, 0
      %p153 = por %p151, %p152
      %s155 = sadd.s32 %s154, 1
      %p158 = scmp.eq.s32.totalorder %s15, 3
      %p159 = scmp.ne.s32.totalorder %s154, %s156
      %p160 = scmp.eq.s32.totalorder %s15, 0
      %p161 = por %p159, %p160
      %p162 = scmp.ne.s32.totalorder %s154, %s156
      %p163 = scmp.eq.s32.totalorder %s20, 3
      %p164 = por %p162, %p163
      %p165 = scmp.ne.s32.totalorder %s156, %s157
      %p166 = scmp.eq.s32.totalorder %s20, 0
      %p167 = por %p165, %p166
      %p168 = scmp.ne.s32.totalorder %s156, %s157
      %p169 = scmp.eq.s32.totalorder %s21, 3
      %p170 = por %p168, %p169
      %p172 = scmp.ne.s32.totalorder %s157, %s171
      %p173 = scmp.eq.s32.totalorder %s21, 0
      %p174 = por %p172, %p173
      %s175 = ssub.s32 %s22, %s34
      %s176 = ssub.s32 %s23, %s30
      %s177 = sor.u32 %s175, %s176
      %p178 = scmp.eq.s32.totalorder %s177, 0
      %s180 = sadd.s32 %s179, 1
      %s181 = scalar_select %p178, %s179, %s180
      %p184 = pneg %p178
      %p185 = scmp.eq.s32.totalorder %s15, 3
      %p186 = por %p184, %p185
      %p187 = scmp.ne.s32.totalorder %s179, %s182
      %p188 = scmp.eq.s32.totalorder %s15, 0
      %p189 = por %p187, %p188
      %p190 = scmp.ne.s32.totalorder %s179, %s182
      %p191 = scmp.eq.s32.totalorder %s20, 3
      %p192 = por %p190, %p191
      %p193 = scmp.ne.s32.totalorder %s182, %s183
      %p194 = scmp.eq.s32.totalorder %s20, 0
      %p195 = por %p193, %p194
      %p196 = scmp.ne.s32.totalorder %s182, %s183
      %p197 = scmp.eq.s32.totalorder %s21, 3
      %p198 = por %p196, %p197
      %p200 = scmp.ne.s32.totalorder %s183, %s199
      %p201 = scmp.eq.s32.totalorder %s21, 0
      %p202 = por %p200, %p201
      %p203 = scmp.le.s32.totalorder 1, %s15
      %p204 = scmp.lt.s32.totalorder %s15, 5
      %p205 = pnand %p203, %p204
      %p206 = pneg %p205
      // Predicated region
      $region9: #{tpu_custom_call.1} parent=5 // pred_check
        _
      $region10: #{tpu_custom_call.1} parent=5 // pred_check_branch
        %208 = sbr.rel (%p205) target = $region12
      $region11: #{tpu_custom_call.1} parent=5 // pred_region
        %s209 = ssub.s32 %s15, 1
        // Predicated region
        $region13: #{tpu_custom_call.1} parent=11 // pred_check
          %p210 = pneg %p104
        $region14: #{tpu_custom_call.1} parent=11 // pred_check_branch
          %212 = sbr.rel (%p210) target = $region16
        $region15: #{tpu_custom_call.1} parent=11 // pred_region
          _
        $region16: #{tpu_custom_call.1} parent=11 // pred_fallthru
          _
        // Predicated region
        $region17: #{tpu_custom_call.1} parent=11 // pred_check
          %p213 = pneg %p125
        $region18: #{tpu_custom_call.1} parent=11 // pred_check_branch
          %215 = sbr.rel (%p213) target = $region20
        $region19: #{tpu_custom_call.1} parent=11 // pred_region
          _
        $region20: #{tpu_custom_call.1} parent=11 // pred_fallthru
          _
        // Predicated region
        $region21: #{tpu_custom_call.1} parent=11 // pred_check
          %p216 = pneg %p146
        $region22: #{tpu_custom_call.1} parent=11 // pred_check_branch
          %218 = sbr.rel (%p216) target = $region24
        $region23: #{tpu_custom_call.1} parent=11 // pred_region
          _
        $region24: #{tpu_custom_call.1} parent=11 // pred_fallthru
          _
        // Predicated region
        $region25: #{tpu_custom_call.1} parent=11 // pred_check
          %p219 = pneg %p167
        $region26: #{tpu_custom_call.1} parent=11 // pred_check_branch
          %221 = sbr.rel (%p219) target = $region28
        $region27: #{tpu_custom_call.1} parent=11 // pred_region
          _
        $region28: #{tpu_custom_call.1} parent=11 // pred_fallthru
          _
      $region12: #{tpu_custom_call.1} parent=5 // pred_fallthru
        _
      %p222 = scmp.lt.s32.totalorder %s15, 4
      // Predicated region
      $region29: #{tpu_custom_call.1} parent=5 // pred_check
        %p223 = pneg %p222
      $region30: #{tpu_custom_call.1} parent=5 // pred_check_branch
        %225 = sbr.rel (%p223) target = $region32
      $region31: #{tpu_custom_call.1} parent=5 // pred_region
        // Predicated region
        $region33: #{tpu_custom_call.1} parent=31 // pred_check
          %p226 = pneg %p49
        $region34: #{tpu_custom_call.1} parent=31 // pred_check_branch
          %228 = sbr.rel (%p226) target = $region36
        $region35: #{tpu_custom_call.1} parent=31 // pred_region
          %s229 = sand.u32 %s39, 1
          %s230 = scalar_lea.sflag [#allocation3], %s229
          %s231 = sand.u32 %s39, 1
          %s232 = smul.addr %s231, 32
          %s233 = scalar_lea.vmem [#allocation2], %s232
          %235 = vsyncadd %s230, 0
          %s236 = smul.addr %s22, 8
          %s237 = sadd.s32 %s23, %s236
          %s238 = smul.addr %s237, 8
          %s239 = scalar_lea.hbm %s0, %s238
          %s240 = sshll.u32 %s239, 4
          %s241 = int_to_ptr.hbm [resolvable:$true] %s240
          %s242 = sshll.u32 %s233, 4
          %s243 = int_to_ptr.vmem [resolvable:$true] %s242
          %248 = dma.hbm_to_vmem [thread:$0]  %s241, 512, %s243, %s230, 256, 128, 8
        $region36: #{tpu_custom_call.1} parent=31 // pred_fallthru
          _
        // Predicated region
        $region37: #{tpu_custom_call.1} parent=31 // pred_check
          %p249 = pneg %p77
        $region38: #{tpu_custom_call.1} parent=31 // pred_check_branch
          %251 = sbr.rel (%p249) target = $region40
        $region39: #{tpu_custom_call.1} parent=31 // pred_region
          %p252 = scmp.lt.s32.totalorder %s22, 1
          %s253 = scalar_select %p252, %s22, 1
          %p254 = scmp.lt.s32.totalorder %s23, 1
          %s255 = scalar_select %p254, %s23, 1
          %s256 = smul.addr %s253, 2
          %s257 = sadd.s32 %s255, %s256
          %s258 = smul.addr %s257, 4
          %s259 = scalar_lea.vmem %s1, %s258
        $region40: #{tpu_custom_call.1} parent=31 // pred_fallthru
          _
      $region32: #{tpu_custom_call.1} parent=5 // pred_fallthru
        _
      %p260 = scmp.le.s32.totalorder 1, %s15
      %p261 = scmp.lt.s32.totalorder %s15, 5
      %p262 = pnand %p260, %p261
      %p263 = pneg %p262
      // Predicated region
      $region41: #{tpu_custom_call.1} parent=5 // pred_check
        _
      $region42: #{tpu_custom_call.1} parent=5 // pred_check_branch
        %265 = sbr.rel (%p262) target = $region44
      $region43: #{tpu_custom_call.1} parent=5 // pred_region
        %s266 = ssub.s32 %s15, 1
        %s267 = sand.u32 %s42, 1
        %s268 = scalar_lea.sflag [#allocation3], %s267
        %s269 = sand.u32 %s42, 1
        %s270 = smul.addr %s269, 32
        %s271 = scalar_lea.vmem [#allocation2], %s270
        // Predicated region
        $region45: #{tpu_custom_call.1} parent=43 // pred_check
          %p272 = pneg %p55
        $region46: #{tpu_custom_call.1} parent=43 // pred_check_branch
          %274 = sbr.rel (%p272) target = $region48
        $region47: #{tpu_custom_call.1} parent=43 // pred_region
          %276 = dma.done %s268, 512
        $region48: #{tpu_custom_call.1} parent=43 // pred_fallthru
          _
        %s277 = sand.u32 %s42, 1
        %s278 = scalar_lea.sflag [#allocation3], %s277
        %s279 = sand.u32 %s42, 1
        %s280 = smul.addr %s279, 32
        %s281 = scalar_lea.vmem [#allocation2], %s280
        %p282 = pneg %p55
        %p283 = pneg %p52
        %p284 = scmp.lt.s32.totalorder %s24, 1
        %s285 = scalar_select %p284, %s24, 1
        %p286 = scmp.lt.s32.totalorder %s25, 1
        %s287 = scalar_select %p286, %s25, 1
        %s288 = smul.addr %s285, 2
        %s289 = sadd.s32 %s287, %s288
        %s290 = smul.addr %s289, 4
        %s291 = scalar_lea.vmem %s1, %s290
        %p292 = pneg %p83
        %p293 = pneg %p80
        %p294 = pneg %p104
        %p295 = pneg %p101
        %p296 = pneg %p125
        %p297 = pneg %p122
        %p298 = pneg %p146
        %p299 = pneg %p143
        %p300 = pneg %p167
        %p301 = pneg %p164
        %p302 = pneg %p195
        %p303 = pneg %p192
        %s304 = sand.u32 %s182, 1
        %s305 = sand.u32 %s182, 1
        %s306 = smul.addr %s305, 8
        %s307 = scalar_lea.vmem [#allocation4], %s306
        %p308 = scmp.lt.s32.totalorder %s24, 1
        %s309 = scalar_select %p308, %s24, 1
        %p310 = scmp.lt.s32.totalorder %s25, 1
        %s311 = scalar_select %p310, %s25, 1
        %s312 = smul.addr %s309, 2
        %s313 = sadd.s32 %s311, %s312
        %s314 = smul.addr %s313, 4
        %s315 = scalar_lea.vmem %s1, %s314
        %v316 = vld [vmem:[%s271] sm:$0xff]
        %v317 = vld [vmem:[%s271 + $0x8] sm:$0xff]
        %v318 = vld [vmem:[%s271 + $0x10] sm:$0xff]
        %v319 = vld [vmem:[%s271 + $0x18] sm:$0xff]
        %v320 = vld [vmem:[%s2] sm:$0xff]
        %v321 = vld [vmem:[%s2 + $0x8] sm:$0xff]
        %v322 = vld [vmem:[%s2 + $0x10] sm:$0xff]
        %v323 = vld [vmem:[%s2 + $0x18] sm:$0xff]
        %v324 = vld [vmem:[%s3] sm:$0xff]
        %v325 = vld [vmem:[%s3 + $0x8] sm:$0xff]
        %v326 = vld [vmem:[%s3 + $0x10] sm:$0xff]
        %v327 = vld [vmem:[%s3 + $0x18] sm:$0xff]
        %329 = vset.pattern.permute.xlu0 0
        %330 = vperm.xlu0 %329, %v324
        %v331 = vpop.permute.xlu0 %330
        %334 = vset.pattern.permute.xlu0 0
        %335 = vperm.xlu0 %334, %v325
        %v336 = vpop.permute.xlu0 %335
        %339 = vset.pattern.permute.xlu0 0
        %340 = vperm.xlu0 %339, %v326
        %v341 = vpop.permute.xlu0 %340
        %344 = vset.pattern.permute.xlu0 0
        %345 = vperm.xlu0 %344, %v327
        %v346 = vpop.permute.xlu0 %345
        %vm348 = vcmask 261120
        %v350 = vsel %vm348, %v320, 0
        %v353 = vsel %vm348, %v321, 0
        %v356 = vsel %vm348, %v322, 0
        %v359 = vsel %vm348, %v323, 0
        %361 = vmatpush.msra.mxu0 0.0
        %362 = vmatpush.msra.mxu0 0.0
        %363 = vmatpush.msra.mxu0 0.0
        %364 = vmatpush.msra.mxu0 0.0
        %365 = vmatpush.msra.mxu0 0.0
        %366 = vmatpush.msra.mxu0 0.0
        %367 = vmatpush.msra.mxu0 0.0
        %368 = vmatpush.msra.mxu0 0.0
        %369 = vmatpush.msra.mxu0 0.0
        %370 = vmatpush.msra.mxu0 0.0
        %371 = vmatpush.msra.mxu0 0.0
        %372 = vmatpush.msra.mxu0 0.0
        %373 = vmatpush.msra.mxu0 %v319
        %374 = vmatpush.msra.mxu0 %v318
        %375 = vmatpush.msra.mxu0 %v317
        %376 = vmatpush.msra.mxu0 %v316
        %377 = vmatmul.f32.gmra.mxu0 %v350
        %v378 = vpop.f32.mrf.mxu0
        %v379 = vadd.f32 %v331, %v378
        %380 = vmatmul.f32.gmra.mxu0 %v353
        %v381 = vpop.f32.mrf.mxu0
        %v382 = vadd.f32 %v336, %v381
        %383 = vmatmul.f32.gmra.mxu0 %v356
        %v384 = vpop.f32.mrf.mxu0
        %v385 = vadd.f32 %v341, %v384
        %386 = vmatmul.f32.gmra.mxu0 %v359
        %v387 = vpop.f32.mrf.mxu0
        %v388 = vadd.f32 %v346, %v387
        %389 = vdwg.mxu0
        %v390 = vmax.f32 %v379, 0.0
        %v391 = vmax.f32 %v382, 0.0
        %v392 = vmax.f32 %v385, 0.0
        %v393 = vmax.f32 %v388, 0.0
        %v394 = vld [vmem:[%s5] sm:$0x7]
        %v395 = vld [vmem:[%s4] sm:$0x7]
        %397 = vset.pattern.permute.xlu0 0
        %398 = vperm.xlu0 %397, %v394
        %v399 = vpop.permute.xlu0 %398
        %v402 = vsel %vm348, %v395, 0
        %404 = vmatpush.msra.mxu0 0.0
        %405 = vmatpush.msra.mxu0 0.0
        %406 = vmatpush.msra.mxu0 0.0
        %407 = vmatpush.msra.mxu0 0.0
        %408 = vmatpush.msra.mxu0 0.0
        %409 = vmatpush.msra.mxu0 0.0
        %410 = vmatpush.msra.mxu0 0.0
        %411 = vmatpush.msra.mxu0 0.0
        %412 = vmatpush.msra.mxu0 0.0
        %413 = vmatpush.msra.mxu0 0.0
        %414 = vmatpush.msra.mxu0 0.0
        %415 = vmatpush.msra.mxu0 0.0
        %416 = vmatpush.msra.mxu0 %v393
        %417 = vmatpush.msra.mxu0 %v392
        %418 = vmatpush.msra.mxu0 %v391
        %419 = vmatpush.msra.mxu0 %v390
        %420 = vmatmul.f32.gmra.mxu0 %v402
        %v421 = vpop.f32.mrf.mxu0
        %v422 = vadd.f32 %v399, %v421
        %423 = vdwg.mxu0
        %v424 = vld [vmem:[%s315] sm:$0x7]
        %425 = vset.pattern.permute.xlu0 1
        %426 = vperm.xlu0 %425, %v394
        %v427 = vpop.permute.xlu0 %426
        %v429 = vmax.f32 %v422, %v427
        %430 = vset.pattern.permute.xlu0 2
        %431 = vperm.xlu0 %430, %v394
        %v432 = vpop.permute.xlu0 %431
        %v434 = vmin.f32 %v429, %v432
        %v435 = vadd.f32 %v424, %v434
        %436 = vst [vmem:[%s307] sm:$0x7] %v422
        %s437 = scalar_lea.vmem %s307, 4 [#allocation4]
        %438 = vst [vmem:[%s437] sm:$0x7] %v435
        %s439 = sand.u32 %s182, 1
        %s440 = sand.u32 %s182, 1
        %s441 = smul.addr %s440, 8
        %s442 = scalar_lea.vmem [#allocation4], %s441
        // Predicated region
        $region49: #{tpu_custom_call.1} parent=43 // pred_check
          %p443 = pneg %p192
        $region50: #{tpu_custom_call.1} parent=43 // pred_check_branch
          %445 = sbr.rel (%p443) target = $region52
        $region51: #{tpu_custom_call.1} parent=43 // pred_region
          %s446 = smul.addr %s24, 4
          %s447 = sadd.s32 %s25, %s446
          %s448 = smul.addr %s447, 4
          %s449 = scalar_lea.vmem %s6, %s448
          // Predicated region
          $region53: #{tpu_custom_call.1} parent=51 // pred_check
            _
          $region54: #{tpu_custom_call.1} parent=51 // pred_check_branch
            %451 = sbr.rel (0) target = $region56
          $region55: #{tpu_custom_call.1} parent=51 // pred_region
            // Predicated region
            $region57: #{tpu_custom_call.1} parent=55 // pred_check
              _
            $region58: #{tpu_custom_call.1} parent=55 // pred_check_branch
              %453 = sbr.rel target = $region60
            $region59: #{tpu_custom_call.1} parent=55 // pred_region
              // Predicated region
              $region72: #{tpu_custom_call.1} parent=59 // pred_check
                _
              $region73: #{tpu_custom_call.1} parent=59 // pred_check_branch
                %471 = sbr.rel (0) target = $region75
              $region74: #{tpu_custom_call.1} parent=59 // pred_region
                loop: start=0, step=1, limit=1
                $region76: #{tpu_custom_call.1} parent=74 // loop_pre_header
                  _
                $region77: #{tpu_custom_call.1} parent=74 // loop_header
                  %s473 = sphi 0, %s477
                  %p474 = scmp.ge.s32.totalorder %s473, 1
                  %s478 = sphi %s442, %s442
                  %s479 = sphi %s449, %s449
                $region78: #{tpu_custom_call.1} parent=74 // loop_header_branch
                  %476 = sbr.rel (%p474) target = $region82
                $region79: #{tpu_custom_call.1} parent=74 // loop_body
                  _
                $region80: #{tpu_custom_call.1} parent=74 // loop_footer
                  %s477 = sadd.s32 1, %s473
                $region81: #{tpu_custom_call.1} parent=74 // loop_footer_branch
                  %472 = sbr.rel target = $region77
                $region82: #{tpu_custom_call.1} parent=74 // loop_exit
                  _
                %s481 = ssub.s32 16, 1
                loop: start=0, step=1, limit=1
                $region83: #{tpu_custom_call.1} parent=74 // loop_pre_header
                  _
                $region84: #{tpu_custom_call.1} parent=74 // loop_header
                  %s483 = sphi 0, %s487
                  %p484 = scmp.ge.s32.totalorder %s483, 1
                  %s488 = sphi %s442, %s442
                  %s489 = sphi %s449, %s449
                $region85: #{tpu_custom_call.1} parent=74 // loop_header_branch
                  %486 = sbr.rel (%p484) target = $region89
                $region86: #{tpu_custom_call.1} parent=74 // loop_body
                  %v490 = vld [vmem:[%s488] sm:%s481]
                  %491 = vst [vmem:[%s489] sm:%s481] %v490
                  %v492 = vld [vmem:[%s488 + $0x4] sm:%s481]
                  %493 = vst [vmem:[%s489 + $0x8] sm:%s481] %v492
                $region87: #{tpu_custom_call.1} parent=74 // loop_footer
                  %s487 = sadd.s32 1, %s483
                $region88: #{tpu_custom_call.1} parent=74 // loop_footer_branch
                  %482 = sbr.rel target = $region84
                $region89: #{tpu_custom_call.1} parent=74 // loop_exit
                  _
              $region75: #{tpu_custom_call.1} parent=59 // pred_fallthru
                _
            $region60: #{tpu_custom_call.1} parent=55 // pred_fallthru
              _
            // Predicated region
            $region61: #{tpu_custom_call.1} parent=55 // pred_check
              _
            $region62: #{tpu_custom_call.1} parent=55 // pred_check_branch
              %455 = sbr.rel (0) target = $region64
            $region63: #{tpu_custom_call.1} parent=55 // pred_region
              %s457 = ssub.s32 16, 1
              loop: start=0, step=1, limit=1
              $region65: #{tpu_custom_call.1} parent=63 // loop_pre_header
                _
              $region66: #{tpu_custom_call.1} parent=63 // loop_header
                %s459 = sphi 0, %s463
                %p460 = scmp.ge.s32.totalorder %s459, 1
                %s464 = sphi %s442, %s442
                %s465 = sphi %s449, %s449
              $region67: #{tpu_custom_call.1} parent=63 // loop_header_branch
                %462 = sbr.rel (%p460) target = $region71
              $region68: #{tpu_custom_call.1} parent=63 // loop_body
                %v466 = vld [vmem:[%s464] sm:%s457]
                %467 = vst [vmem:[%s465] sm:%s457] %v466
                %v468 = vld [vmem:[%s464 + $0x4] sm:%s457]
                %469 = vst [vmem:[%s465 + $0x8] sm:%s457] %v468
              $region69: #{tpu_custom_call.1} parent=63 // loop_footer
                %s463 = sadd.s32 1, %s459
              $region70: #{tpu_custom_call.1} parent=63 // loop_footer_branch
                %458 = sbr.rel target = $region66
              $region71: #{tpu_custom_call.1} parent=63 // loop_exit
                _
            $region64: #{tpu_custom_call.1} parent=55 // pred_fallthru
              _
          $region56: #{tpu_custom_call.1} parent=51 // pred_fallthru
            _
          %494 = vnop
        $region52: #{tpu_custom_call.1} parent=43 // pred_fallthru
          _
      $region44: #{tpu_custom_call.1} parent=5 // pred_fallthru
        _
      %p495 = scmp.le.s32.totalorder 2, %s15
      // Predicated region
      $region90: #{tpu_custom_call.1} parent=5 // pred_check
        %p496 = pneg %p495
      $region91: #{tpu_custom_call.1} parent=5 // pred_check_branch
        %498 = sbr.rel (%p496) target = $region93
      $region92: #{tpu_custom_call.1} parent=5 // pred_region
        %s499 = ssub.s32 %s15, 2
        // Predicated region
        $region94: #{tpu_custom_call.1} parent=92 // pred_check
          %p500 = pneg %p198
        $region95: #{tpu_custom_call.1} parent=92 // pred_check_branch
          %502 = sbr.rel (%p500) target = $region97
        $region96: #{tpu_custom_call.1} parent=92 // pred_region
          %s503 = sand.u32 %s183, 1
          %s504 = sand.u32 %s183, 1
          %s505 = smul.addr %s504, 8
          %s506 = scalar_lea.vmem [#allocation4], %s505
        $region97: #{tpu_custom_call.1} parent=92 // pred_fallthru
          _
      $region93: #{tpu_custom_call.1} parent=5 // pred_fallthru
        _
    $region6: #{tpu_custom_call.1} parent=1 // loop_footer
      %s19 = sadd.s32 1, %s15
    $region7: #{tpu_custom_call.1} parent=1 // loop_footer_branch
      %14 = sbr.rel target = $region3
    $region8: #{tpu_custom_call.1} parent=1 // loop_exit
      _
    %507 = vsyncpa [#allocation3], 1
    %s508 = scalar_lea.sflag [#allocation3], 1
    %509 = vsyncpa %s508, 1

</llo_original>
